<compile_context>
chip_gen: v7x
topology: tpu7x:2x2x1
jax: 0.10.0
libtpu: 0.0.40
codegen_flags: <defaults>
</compile_context>

<pallas_src>
import functools

import jax
import jax.numpy as jnp
from jax.experimental import pallas as pl
from jax.experimental.pallas import tpu as pltpu


def _dice_stats_kernel(
    y_ref,
    l_ref,
    out_ref,
    *,
    chunks_per_split,
    num_chunks,
    r_total,
    tr,
    needs_mask,
):
    """Accumulate lane-parallel (inter, sum_y, sum_l) partials per sample.

    y_ref / l_ref: (1, TR, 128) input tiles for sample i, chunk (p, j).
    out_ref:       (1, 1, 3, 128) resident accumulator for (sample i, split p).
    """
    p = pl.program_id(1)
    j = pl.program_id(2)
    chunk = p * chunks_per_split + j  # global feature-chunk index

    y = y_ref[0].astype(jnp.float32)  # (TR, 128)
    l = l_ref[0].astype(jnp.float32)  # (TR, 128)

    def emit(yv, lv):
        prod = yv * lv
        # Sublane-axis reductions only: results stay lane-dense (1, 128).
        partial = jnp.concatenate(
            [
                jnp.sum(prod, axis=0, keepdims=True),  # intersection
                jnp.sum(yv, axis=0, keepdims=True),    # sum(y)
                jnp.sum(lv, axis=0, keepdims=True),    # sum(label)
            ],
            axis=0,
        )  # (3, 128)

        # Single whole-block store per step; write (not +=) on the first
        # chunk of this (sample, split) so no separate zero-init pass exists.
        @pl.when(j == 0)
        def _():
            out_ref[0, 0] = partial

        @pl.when(j != 0)
        def _():
            out_ref[0, 0] += partial

    if needs_mask:
        # Mask only the final (ragged) chunk; interior chunks stay unmasked.
        @pl.when(chunk != num_chunks - 1)
        def _():
            emit(y, l)

        @pl.when(chunk == num_chunks - 1)
        def _():
            row = jax.lax.broadcasted_iota(jnp.int32, (tr, 128), 0) + chunk * tr
            valid = row < r_total
            # Select (not multiply): garbage/NaN in OOB rows cannot leak.
            emit(jnp.where(valid, y, 0.0), jnp.where(valid, l, 0.0))
    else:
        emit(y, l)


def dice_loss(y_s, label_s, smooth=1.0, *, tile_rows=8192):
    """Dice loss. y_s / label_s are arbitrary-rank arrays with leading batch dim."""
    n = y_s.shape[0]
    y2 = y_s.reshape(n, -1)
    l2 = label_s.reshape(n, -1)
    d = y2.shape[1]

    # Fallback only when the feature dim is not lane-aligned (zeros are
    # neutral to all three sums). The common conv-feature case has D % 128 == 0
    # and skips this extra pass entirely.
    if d % 128 != 0:
        pad = (-d) % 128
        y2 = jnp.pad(y2, ((0, 0), (0, pad)))
        l2 = jnp.pad(l2, ((0, 0), (0, pad)))
        d = d + pad

    r = d // 128
    # View each sample as (R, 128): contiguous reshape, no data movement.
    y3 = y2.reshape(n, r, 128)
    l3 = l2.reshape(n, r, 128)

    # Row-chunk size: either the full R (allowed as "equal to full dim") or a
    # large multiple of 8. Clamp so the double-buffered footprint
    # (2 inputs x 2 buffers x TR*512 B) stays well under the VMEM limit below.
    tile_rows = min(int(tile_rows), 16384)
    tile_rows = max(8, (tile_rows // 8) * 8)
    tr = min(r, tile_rows)
    num_chunks = pl.cdiv(r, tr)
    needs_mask = (r % tr) != 0

    # Megacore (v7x): split the reduction axis with a small leading parallel
    # axis of 2 when the chunk count divides evenly, so both TensorCores stay
    # busy even when N is tiny. Harmless on v5e/v6e (single TC).
    n_split = 2 if (num_chunks >= 2 and num_chunks % 2 == 0) else 1
    cps = num_chunks // n_split

    kernel = functools.partial(
        _dice_stats_kernel,
        chunks_per_split=cps,
        num_chunks=num_chunks,
        r_total=r,
        tr=tr,
        needs_mask=needs_mask,
    )

    # 48 MiB: above the 16/32 MiB scoped defaults, comfortably below v7x's
    # 64 MiB physical VMEM; max footprint at TR=16384 is 32 MiB.
    vmem_limit = 48 * 1024 * 1024

    stats = pl.pallas_call(
        kernel,
        out_shape=jax.ShapeDtypeStruct((n, n_split, 3, 128), jnp.float32),
        grid_spec=pltpu.PrefetchScalarGridSpec(
            num_scalar_prefetch=0,
            grid=(n, n_split, cps),
            in_specs=[
                pl.BlockSpec((1, tr, 128), lambda i, p, j: (i, p * cps + j, 0)),
                pl.BlockSpec((1, tr, 128), lambda i, p, j: (i, p * cps + j, 0)),
            ],
            out_specs=pl.BlockSpec((1, 1, 3, 128), lambda i, p, j: (i, p, 0, 0)),
        ),
        compiler_params=pltpu.CompilerParams(
            dimension_semantics=("parallel", "parallel", "arbitrary"),
            vmem_limit_bytes=vmem_limit,
        ),
    )(y3, l3)

    # Tiny finalize: reduce over the split axis and the 128 lanes, then dice.
    # TODO(synk): optionally fuse this epilogue (XLU cross-lane sum + EUP
    # reciprocal) into the kernel's last chunk to drop the extra XLA reduce.
    totals = jnp.sum(stats, axis=(1, 3))  # (N, 3)
    inter = totals[:, 0]
    sy = totals[:, 1]
    sl = totals[:, 2]
    dice = 2.0 * (inter + smooth) / (sy + sl + smooth)
    return 1.0 - jnp.sum(dice) / float(n)


def _dice_loss_ref(y_s, label_s, smooth=1.0):
    n = y_s.shape[0]
    y = y_s.reshape(n, -1).astype(jnp.float32)
    l = label_s.reshape(n, -1).astype(jnp.float32)
    inter = jnp.sum(y * l, axis=1)
    dice = 2.0 * (inter + smooth) / (jnp.sum(y, axis=1) + jnp.sum(l, axis=1) + smooth)
    return 1.0 - jnp.sum(dice) / n


if __name__ == "__main__":
    key = jax.random.PRNGKey(0)
    k1, k2, k3, k4 = jax.random.split(key, 4)

    # Main check: NCHW inputs, as a segmentation net would produce.
    y_s = jax.nn.sigmoid(jax.random.normal(k1, (2, 4, 16, 16), dtype=jnp.float32))
    label_s = (jax.random.uniform(k2, (2, 4, 16, 16)) > 0.5).astype(jnp.float32)

    loss = dice_loss(y_s, label_s, smooth=1.0)
    jax.block_until_ready(loss)
    ref = _dice_loss_ref(y_s, label_s, smooth=1.0)
    assert jnp.allclose(loss, ref, rtol=1e-5, atol=1e-5), (loss, ref)

    # Secondary check: exercises the lane-pad, ragged-last-chunk mask and the
    # split reduction axis (tile_rows forced small so R > TR).
    y_b = jax.nn.sigmoid(jax.random.normal(k3, (3, 3, 37, 17), dtype=jnp.float32))
    l_b = (jax.random.uniform(k4, (3, 3, 37, 17)) > 0.5).astype(jnp.float32)
    loss_b = dice_loss(y_b, l_b, smooth=1.0, tile_rows=8)
    jax.block_until_ready(loss_b)
    ref_b = _dice_loss_ref(y_b, l_b, smooth=1.0)
    assert jnp.allclose(loss_b, ref_b, rtol=1e-5, atol=1e-5), (loss_b, ref_b)

    print("KERNEL_OK")
</pallas_src>

<mosaic_0001>
module attributes {stable_mosaic.version = 11 : i64} {
  func.func @_dice_stats_kernel(%arg0: i32, %arg1: i32, %arg2: i32, %arg3: memref<1x8x128xf32, #tpu.memory_space<vmem>>, %arg4: memref<1x8x128xf32, #tpu.memory_space<vmem>>, %arg5: memref<1x1x3x128xf32, #tpu.memory_space<vmem>>) attributes {dimension_semantics = [#tpu.dimension_semantics<parallel>, #tpu.dimension_semantics<parallel>, #tpu.dimension_semantics<arbitrary>], iteration_bounds = array<i64: 2, 1, 1>, scalar_prefetch = 0 : i64, scratch_operands = 0 : i64, tpu.core_type = #tpu.core_type<tc>, window_params = [{transform_indices = @transform_0, window_bounds = array<i64: 1, 8, 128>}, {transform_indices = @transform_1, window_bounds = array<i64: 1, 8, 128>}, {transform_indices = @transform_2, window_bounds = array<i64: 1, 1, 3, 128>}]} {
    %c0 = arith.constant 0 : index
    %c0_0 = arith.constant 0 : index
    %c0_1 = arith.constant 0 : index
    %0 = vector.load %arg3[%c0, %c0_0, %c0_1] : memref<1x8x128xf32, #tpu.memory_space<vmem>>, vector<1x8x128xf32>
    %1 = vector.shape_cast %0 : vector<1x8x128xf32> to vector<8x128xf32>
    %c0_2 = arith.constant 0 : index
    %c0_3 = arith.constant 0 : index
    %c0_4 = arith.constant 0 : index
    %2 = vector.load %arg4[%c0_2, %c0_3, %c0_4] : memref<1x8x128xf32, #tpu.memory_space<vmem>>, vector<1x8x128xf32>
    %3 = vector.shape_cast %2 : vector<1x8x128xf32> to vector<8x128xf32>
    %4 = arith.mulf %1, %3 : vector<8x128xf32>
    %cst = arith.constant dense<0.000000e+00> : vector<128xf32>
    %5 = vector.multi_reduction <add>, %4, %cst [0] : vector<8x128xf32> to vector<128xf32>
    %6 = vector.shape_cast %5 : vector<128xf32> to vector<1x128xf32>
    %cst_5 = arith.constant dense<0.000000e+00> : vector<128xf32>
    %7 = vector.multi_reduction <add>, %1, %cst_5 [0] : vector<8x128xf32> to vector<128xf32>
    %8 = vector.shape_cast %7 : vector<128xf32> to vector<1x128xf32>
    %cst_6 = arith.constant dense<0.000000e+00> : vector<128xf32>
    %9 = vector.multi_reduction <add>, %3, %cst_6 [0] : vector<8x128xf32> to vector<128xf32>
    %10 = vector.shape_cast %9 : vector<128xf32> to vector<1x128xf32>
    %11 = tpu.concatenate %6, %8, %10 in 0 : vector<1x128xf32>, vector<1x128xf32>, vector<1x128xf32> -> vector<3x128xf32>
    %c0_i32 = arith.constant 0 : i32
    %12 = arith.cmpi eq, %arg2, %c0_i32 : i32
    %13 = arith.extui %12 : i1 to i32
    %c0_i32_7 = arith.constant 0 : i32
    %14 = arith.cmpi ne, %13, %c0_i32_7 : i32
    scf.if %14 {
      %c0_10 = arith.constant 0 : index
      %c0_11 = arith.constant 0 : index
      %c0_12 = arith.constant 0 : index
      %c0_13 = arith.constant 0 : index
      %18 = vector.load %arg5[%c0_10, %c0_11, %c0_12, %c0_13] : memref<1x1x3x128xf32, #tpu.memory_space<vmem>>, vector<1x1x3x128xf32>
      %19 = vector.shape_cast %18 : vector<1x1x3x128xf32> to vector<3x128xf32>
      %20 = vector.shape_cast %11 : vector<3x128xf32> to vector<1x1x3x128xf32>
      tpu.vector_store %arg5[%c0_10, %c0_11, %c0_12, %c0_13], %20 {strides = array<i32>} : memref<1x1x3x128xf32, #tpu.memory_space<vmem>>, vector<1x1x3x128xf32>,
    } else {
    }
    %c0_i32_8 = arith.constant 0 : i32
    %15 = arith.cmpi ne, %arg2, %c0_i32_8 : i32
    %16 = arith.extui %15 : i1 to i32
    %c0_i32_9 = arith.constant 0 : i32
    %17 = arith.cmpi ne, %16, %c0_i32_9 : i32
    scf.if %17 {
      %c0_10 = arith.constant 0 : index
      %c0_11 = arith.constant 0 : index
      %c0_12 = arith.constant 0 : index
      %c0_13 = arith.constant 0 : index
      %18 = vector.load %arg5[%c0_10, %c0_11, %c0_12, %c0_13] : memref<1x1x3x128xf32, #tpu.memory_space<vmem>>, vector<1x1x3x128xf32>
      %19 = vector.shape_cast %18 : vector<1x1x3x128xf32> to vector<3x128xf32>
      %20 = arith.addf %19, %11 : vector<3x128xf32>
      %c0_14 = arith.constant 0 : index
      %c0_15 = arith.constant 0 : index
      %c0_16 = arith.constant 0 : index
      %c0_17 = arith.constant 0 : index
      %21 = vector.load %arg5[%c0_14, %c0_15, %c0_16, %c0_17] : memref<1x1x3x128xf32, #tpu.memory_space<vmem>>, vector<1x1x3x128xf32>
      %22 = vector.shape_cast %21 : vector<1x1x3x128xf32> to vector<3x128xf32>
      %23 = vector.shape_cast %20 : vector<3x128xf32> to vector<1x1x3x128xf32>
      tpu.vector_store %arg5[%c0_14, %c0_15, %c0_16, %c0_17], %23 {strides = array<i32>} : memref<1x1x3x128xf32, #tpu.memory_space<vmem>>, vector<1x1x3x128xf32>,
    } else {
    }
    return
  }
  func.func @transform_0(%arg0: i32, %arg1: i32, %arg2: i32) -> (i32, i32, i32) {
    %c1_i32 = arith.constant 1 : i32
    %0 = arith.muli %arg1, %c1_i32 : i32
    %1 = arith.addi %0, %arg2 : i32
    %c0_i32 = arith.constant 0 : i32
    %c0_i32_0 = arith.constant 0 : i32
    return %arg0, %1, %c0_i32 : i32, i32, i32
  }
  func.func @transform_1(%arg0: i32, %arg1: i32, %arg2: i32) -> (i32, i32, i32) {
    %c1_i32 = arith.constant 1 : i32
    %0 = arith.muli %arg1, %c1_i32 : i32
    %1 = arith.addi %0, %arg2 : i32
    %c0_i32 = arith.constant 0 : i32
    %c0_i32_0 = arith.constant 0 : i32
    return %arg0, %1, %c0_i32 : i32, i32, i32
  }
  func.func @transform_2(%arg0: i32, %arg1: i32, %arg2: i32) -> (i32, i32, i32, i32) {
    %c0_i32 = arith.constant 0 : i32
    %c0_i32_0 = arith.constant 0 : i32
    %c0_i32_1 = arith.constant 0 : i32
    return %arg0, %arg1, %c0_i32, %c0_i32_0 : i32, i32, i32, i32
  }
}

</mosaic_0001>

<llo_original>
// kernel: tpu_custom_call.1
$region0: #{tpu_custom_call.1}
  #allocation0 [shape = 'u32[]', space=smem, size = 0x4, offset = 0x4, fixed_abs, tag = 'smem constant byte address 0x4 - core index']
  #allocation1 [shape = 'u32[144,128]{1,0:T(1,128)}', space=vmem, size = 0x12000, scoped, tag = 'internal scratch']
  %s0 = inlined_call_operand.hbm [shape: f32[2,8,128], index: 0, kind: input, shape index: {}]
  %s1 = inlined_call_operand.hbm [shape: f32[2,8,128], index: 1, kind: input, shape index: {}]
  %s2 = inlined_call_operand.vmem [shape: f32[2,1,3,128], index: 2, kind: output, shape index: {}]
  %s3 = sld [smem:[#allocation0]]
  $region57: #{tpu_custom_call.1} parent=0
    _
  %s5 = ssub.s32 1, %s3
  %s6 = scalar_select 0, %s5, %s3
  $region1: #{tpu_custom_call.1} parent=0
    #allocation2 [shape = 'u8[8192]{0}', space=vmem, size = 0x2000, scoped, tag = 'input window, operand 0']
    #allocation3 [shape = 's32[2]{0}', space=sflag, size = 0x8, scoped, tag = 'scoped memory for tpu_custom_call.1']
    #allocation4 [shape = 'u8[8192]{0}', space=vmem, size = 0x2000, scoped, tag = 'input window, operand 1']
    #allocation5 [shape = 's32[2]{0}', space=sflag, size = 0x8, scoped, tag = 'scoped memory for tpu_custom_call.1']
    %7 = vsyncpa [#allocation3], 0
    %s8 = scalar_lea.sflag [#allocation3], 1
    %9 = vsyncpa %s8, 0
    %10 = vsyncpa [#allocation5], 0
    %s11 = scalar_lea.sflag [#allocation5], 1
    %12 = vsyncpa %s11, 0
    loop: start=0, step=1, limit=4
    $region2: #{tpu_custom_call.1} parent=1 // loop_pre_header
      _
    $region3: #{tpu_custom_call.1} parent=1 // loop_header
      %s14 = sphi 0, %s18
      %p15 = scmp.ge.s32.totalorder %s14, 4
      %s21 = sphi 0, %s40
      %s22 = sphi 0, %s36
      %s23 = sphi 0, %s32
      %s24 = sphi 0, %s21
      %s25 = sphi 0, %s22
      %s26 = sphi 0, %s23
      %s27 = sphi 0, %s24
      %s28 = sphi 0, %s25
      %s29 = sphi 0, %s26
      %s47 = sphi 0, %s49
      %s50 = sphi 0, %s47
      %s51 = sphi 0, %s50
      %s67 = sphi 0, %s51
      %s77 = sphi 0, %s79
      %s80 = sphi 0, %s77
      %s81 = sphi 0, %s80
      %s97 = sphi 0, %s81
      %s105 = sphi 0, %s107
      %s108 = sphi 0, %s105
      %s109 = sphi 0, %s108
      %s125 = sphi 0, %s109
    $region4: #{tpu_custom_call.1} parent=1 // loop_header_branch
      %17 = sbr.rel (%p15) target = $region8
    $region5: #{tpu_custom_call.1} parent=1 // loop_body
      %s19 = ssub.s32 %s14, 1
      %s20 = ssub.s32 %s14, 2
      %s30 = sadd.s32 1, %s23
      %p31 = scmp.ge.s32.totalorder %s30, 1
      %s32 = scalar_select %p31, 0, %s30
      %s33 = sadd.s32 1, %s22
      %s34 = scalar_select %p31, %s33, %s22
      %p35 = scmp.ge.s32.totalorder %s34, 1
      %s36 = scalar_select %p35, 0, %s34
      %s37 = sadd.s32 1, %s21
      %s38 = scalar_select %p35, %s37, %s21
      %p39 = scmp.ge.s32.totalorder %s38, 2
      %s40 = scalar_select %p39, 0, %s38
      %s41 = sadd.s32 %s22, %s23
      %s42 = sadd.s32 %s36, %s32
      %s43 = ssub.s32 %s21, %s40
      %s44 = ssub.s32 %s41, %s42
      %s45 = sor.u32 %s43, %s44
      %p46 = scmp.eq.s32.totalorder %s45, 0
      %s48 = sadd.s32 %s47, 1
      %s49 = scalar_select %p46, %s47, %s48
      %p52 = pneg %p46
      %p53 = scmp.eq.s32.totalorder %s14, 1
      %p54 = por %p52, %p53
      %p55 = scmp.ne.s32.totalorder %s47, %s50
      %p56 = scmp.eq.s32.totalorder %s14, 0
      %p57 = por %p55, %p56
      %p58 = scmp.ne.s32.totalorder %s47, %s50
      %p59 = scmp.eq.s32.totalorder %s19, 1
      %p60 = por %p58, %p59
      %p61 = scmp.ne.s32.totalorder %s50, %s51
      %p62 = scmp.eq.s32.totalorder %s19, 0
      %p63 = por %p61, %p62
      %p64 = scmp.ne.s32.totalorder %s50, %s51
      %p65 = scmp.eq.s32.totalorder %s20, 1
      %p66 = por %p64, %p65
      %p68 = scmp.ne.s32.totalorder %s51, %s67
      %p69 = scmp.eq.s32.totalorder %s20, 0
      %p70 = por %p68, %p69
      %s71 = sadd.s32 %s22, %s23
      %s72 = sadd.s32 %s36, %s32
      %s73 = ssub.s32 %s21, %s40
      %s74 = ssub.s32 %s71, %s72
      %s75 = sor.u32 %s73, %s74
      %p76 = scmp.eq.s32.totalorder %s75, 0
      %s78 = sadd.s32 %s77, 1
      %s79 = scalar_select %p76, %s77, %s78
      %p82 = pneg %p76
      %p83 = scmp.eq.s32.totalorder %s14, 1
      %p84 = por %p82, %p83
      %p85 = scmp.ne.s32.totalorder %s77, %s80
      %p86 = scmp.eq.s32.totalorder %s14, 0
      %p87 = por %p85, %p86
      %p88 = scmp.ne.s32.totalorder %s77, %s80
      %p89 = scmp.eq.s32.totalorder %s19, 1
      %p90 = por %p88, %p89
      %p91 = scmp.ne.s32.totalorder %s80, %s81
      %p92 = scmp.eq.s32.totalorder %s19, 0
      %p93 = por %p91, %p92
      %p94 = scmp.ne.s32.totalorder %s80, %s81
      %p95 = scmp.eq.s32.totalorder %s20, 1
      %p96 = por %p94, %p95
      %p98 = scmp.ne.s32.totalorder %s81, %s97
      %p99 = scmp.eq.s32.totalorder %s20, 0
      %p100 = por %p98, %p99
      %s101 = ssub.s32 %s21, %s40
      %s102 = ssub.s32 %s22, %s36
      %s103 = sor.u32 %s101, %s102
      %p104 = scmp.eq.s32.totalorder %s103, 0
      %s106 = sadd.s32 %s105, 1
      %s107 = scalar_select %p104, %s105, %s106
      %p110 = pneg %p104
      %p111 = scmp.eq.s32.totalorder %s14, 1
      %p112 = por %p110, %p111
      %p113 = scmp.ne.s32.totalorder %s105, %s108
      %p114 = scmp.eq.s32.totalorder %s14, 0
      %p115 = por %p113, %p114
      %p116 = scmp.ne.s32.totalorder %s105, %s108
      %p117 = scmp.eq.s32.totalorder %s19, 1
      %p118 = por %p116, %p117
      %p119 = scmp.ne.s32.totalorder %s108, %s109
      %p120 = scmp.eq.s32.totalorder %s19, 0
      %p121 = por %p119, %p120
      %p122 = scmp.ne.s32.totalorder %s108, %s109
      %p123 = scmp.eq.s32.totalorder %s20, 1
      %p124 = por %p122, %p123
      %p126 = scmp.ne.s32.totalorder %s109, %s125
      %p127 = scmp.eq.s32.totalorder %s20, 0
      %p128 = por %p126, %p127
      %p129 = scmp.le.s32.totalorder 1, %s14
      %p130 = scmp.lt.s32.totalorder %s14, 3
      %p131 = pnand %p129, %p130
      %p132 = pneg %p131
      // Predicated region
      $region9: #{tpu_custom_call.1} parent=5 // pred_check
        _
      $region10: #{tpu_custom_call.1} parent=5 // pred_check_branch
        %134 = sbr.rel (%p131) target = $region12
      $region11: #{tpu_custom_call.1} parent=5 // pred_region
        %s135 = ssub.s32 %s14, 1
      $region12: #{tpu_custom_call.1} parent=5 // pred_fallthru
        _
      %p136 = scmp.lt.s32.totalorder %s14, 2
      // Predicated region
      $region13: #{tpu_custom_call.1} parent=5 // pred_check
        %p137 = pneg %p136
      $region14: #{tpu_custom_call.1} parent=5 // pred_check_branch
        %139 = sbr.rel (%p137) target = $region16
      $region15: #{tpu_custom_call.1} parent=5 // pred_region
        // Predicated region
        $region17: #{tpu_custom_call.1} parent=15 // pred_check
          %p140 = pneg %p57
        $region18: #{tpu_custom_call.1} parent=15 // pred_check_branch
          %142 = sbr.rel (%p140) target = $region20
        $region19: #{tpu_custom_call.1} parent=15 // pred_region
          %s143 = sand.u32 %s47, 1
          %s144 = scalar_lea.sflag [#allocation3], %s143
          %s145 = sand.u32 %s47, 1
          %s146 = smul.addr %s145, 8
          %s147 = scalar_lea.vmem [#allocation2], %s146
          %s148 = sadd.s32 %s22, %s23
          %s150 = ssub.s32 128, 128
          %151 = vsyncadd %s144, %s150
          %s152 = sadd.s32 %s148, %s21
          %s153 = smul.addr %s152, 128
          %s154 = scalar_lea.hbm %s0, %s153
          %s156 = sshll.u32 %s147, 4
          %s157 = int_to_ptr.vmem [resolvable:$true] %s156
          %159 = dma.hbm_to_vmem [thread:$0]  %s154, 128, %s157, %s144
        $region20: #{tpu_custom_call.1} parent=15 // pred_fallthru
          _
        // Predicated region
        $region21: #{tpu_custom_call.1} parent=15 // pred_check
          %p160 = pneg %p87
        $region22: #{tpu_custom_call.1} parent=15 // pred_check_branch
          %162 = sbr.rel (%p160) target = $region24
        $region23: #{tpu_custom_call.1} parent=15 // pred_region
          %s163 = sand.u32 %s77, 1
          %s164 = scalar_lea.sflag [#allocation5], %s163
          %s165 = sand.u32 %s77, 1
          %s166 = smul.addr %s165, 8
          %s167 = scalar_lea.vmem [#allocation4], %s166
          %s168 = sadd.s32 %s22, %s23
          %s170 = ssub.s32 128, 128
          %171 = vsyncadd %s164, %s170
          %s172 = sadd.s32 %s168, %s21
          %s173 = smul.addr %s172, 128
          %s174 = scalar_lea.hbm %s1, %s173
          %s176 = sshll.u32 %s167, 4
          %s177 = int_to_ptr.vmem [resolvable:$true] %s176
          %179 = dma.hbm_to_vmem [thread:$0]  %s174, 128, %s177, %s164
        $region24: #{tpu_custom_call.1} parent=15 // pred_fallthru
          _
      $region16: #{tpu_custom_call.1} parent=5 // pred_fallthru
        _
      %p180 = scmp.le.s32.totalorder 1, %s14
      %p181 = scmp.lt.s32.totalorder %s14, 3
      %p182 = pnand %p180, %p181
      %p183 = pneg %p182
      // Predicated region
      $region25: #{tpu_custom_call.1} parent=5 // pred_check
        _
      $region26: #{tpu_custom_call.1} parent=5 // pred_check_branch
        %185 = sbr.rel (%p182) target = $region28
      $region27: #{tpu_custom_call.1} parent=5 // pred_region
        %s186 = ssub.s32 %s14, 1
        %s187 = sand.u32 %s50, 1
        %s188 = scalar_lea.sflag [#allocation3], %s187
        %s189 = sand.u32 %s50, 1
        %s190 = smul.addr %s189, 8
        %s191 = scalar_lea.vmem [#allocation2], %s190
        // Predicated region
        $region29: #{tpu_custom_call.1} parent=27 // pred_check
          %p192 = pneg %p63
        $region30: #{tpu_custom_call.1} parent=27 // pred_check_branch
          %194 = sbr.rel (%p192) target = $region32
        $region31: #{tpu_custom_call.1} parent=27 // pred_region
          %195 = dma.done %s188, 128
        $region32: #{tpu_custom_call.1} parent=27 // pred_fallthru
          _
        %s196 = sand.u32 %s80, 1
        %s197 = scalar_lea.sflag [#allocation5], %s196
        %s198 = sand.u32 %s80, 1
        %s199 = smul.addr %s198, 8
        %s200 = scalar_lea.vmem [#allocation4], %s199
        // Predicated region
        $region33: #{tpu_custom_call.1} parent=27 // pred_check
          %p201 = pneg %p93
        $region34: #{tpu_custom_call.1} parent=27 // pred_check_branch
          %203 = sbr.rel (%p201) target = $region36
        $region35: #{tpu_custom_call.1} parent=27 // pred_region
          %204 = dma.done %s197, 128
        $region36: #{tpu_custom_call.1} parent=27 // pred_fallthru
          _
        %s205 = sand.u32 %s50, 1
        %s206 = scalar_lea.sflag [#allocation3], %s205
        %s207 = sand.u32 %s50, 1
        %s208 = smul.addr %s207, 8
        %s209 = scalar_lea.vmem [#allocation2], %s208
        %p210 = pneg %p63
        %p211 = pneg %p60
        %s212 = sand.u32 %s80, 1
        %s213 = scalar_lea.sflag [#allocation5], %s212
        %s214 = sand.u32 %s80, 1
        %s215 = smul.addr %s214, 8
        %s216 = scalar_lea.vmem [#allocation4], %s215
        %p217 = pneg %p93
        %p218 = pneg %p90
        %p219 = pneg %p121
        %p220 = pneg %p118
        %p221 = scmp.lt.s32.totalorder %s24, 1
        %s222 = scalar_select %p221, %s24, 1
        %p223 = scmp.lt.s32.totalorder %s25, 0
        %s224 = scalar_select %p223, %s25, 0
        %s225 = sadd.s32 %s224, %s222
        %s226 = smul.addr %s225, 4
        %s227 = scalar_lea.vmem %s2, %s226
        %s228 = sadd.s32 %s25, %s26
        %s229 = sadd.s32 %s25, %s26
        %p230 = scmp.lt.s32.totalorder %s24, 1
        %s231 = scalar_select %p230, %s24, 1
        %p232 = scmp.lt.s32.totalorder %s25, 0
        %s233 = scalar_select %p232, %s25, 0
        %s234 = sadd.s32 %s233, %s231
        %s235 = smul.addr %s234, 4
        %s236 = scalar_lea.vmem %s2, %s235
        %v237 = vld [vmem:[%s191] sm:$0xff]
        %v238 = vld [vmem:[%s200] sm:$0xff]
        %v239 = vmul.f32 %v237, %v238
        %v240 = vrot.slane %v239, 4
        %v241 = vadd.f32 %v239, %v240
        %v242 = vrot.slane %v241, 2
        %v243 = vadd.f32 %v241, %v242
        %v244 = vrot.slane %v243, 1
        %v245 = vadd.f32 %v243, %v244
        %v246 = vrot.slane %v237, 4
        %v247 = vadd.f32 %v237, %v246
        %v248 = vrot.slane %v247, 2
        %v249 = vadd.f32 %v247, %v248
        %v250 = vrot.slane %v249, 1
        %v251 = vadd.f32 %v249, %v250
        %v252 = vrot.slane %v238, 4
        %v253 = vadd.f32 %v238, %v252
        %v254 = vrot.slane %v253, 2
        %v255 = vadd.f32 %v253, %v254
        %v256 = vrot.slane %v255, 1
        %v257 = vadd.f32 %v255, %v256
        %vm258 = vcmask 1040384
        %v259 = vsel %vm258, %v245, %v251
        %vm260 = vcmask 1041408
        %v261 = vsel %vm260, %v259, %v257
        %p262 = scmp.eq.s32.totalorder %s26, 0
        // Predicated region
        $region37: #{tpu_custom_call.1} parent=27 // pred_check
          %p263 = pneg %p262
        $region38: #{tpu_custom_call.1} parent=27 // pred_check_branch
          %265 = sbr.rel (%p263) target = $region40
        $region39: #{tpu_custom_call.1} parent=27 // pred_region
          %266 = vst [vmem:[%s236] sm:$0x7] %v261
        $region40: #{tpu_custom_call.1} parent=27 // pred_fallthru
          _
        %p267 = scmp.ne.s32.totalorder %s26, 0
        // Predicated region
        $region41: #{tpu_custom_call.1} parent=27 // pred_check
          %p268 = pneg %p267
        $region42: #{tpu_custom_call.1} parent=27 // pred_check_branch
          %270 = sbr.rel (%p268) target = $region44
        $region43: #{tpu_custom_call.1} parent=27 // pred_region
          %v271 = vld [vmem:[%s236] sm:$0x7]
          %v272 = vadd.f32 %v271, %v261
          %273 = vst [vmem:[%s236] sm:$0x7] %v272
        $region44: #{tpu_custom_call.1} parent=27 // pred_fallthru
          _
        %p274 = scmp.lt.s32.totalorder %s24, 1
        %s275 = scalar_select %p274, %s24, 1
        %p276 = scmp.lt.s32.totalorder %s25, 0
        %s277 = scalar_select %p276, %s25, 0
        %s278 = sadd.s32 %s277, %s275
        %s279 = smul.addr %s278, 4
        %s280 = scalar_lea.vmem %s2, %s279
        // Predicated region
        $region45: #{tpu_custom_call.1} parent=27 // pred_check
          %p281 = pneg %p118
        $region46: #{tpu_custom_call.1} parent=27 // pred_check_branch
          %283 = sbr.rel (%p281) target = $region48
        $region47: #{tpu_custom_call.1} parent=27 // pred_region
          _
        $region48: #{tpu_custom_call.1} parent=27 // pred_fallthru
          _
      $region28: #{tpu_custom_call.1} parent=5 // pred_fallthru
        _
      %p284 = scmp.le.s32.totalorder 2, %s14
      // Predicated region
      $region49: #{tpu_custom_call.1} parent=5 // pred_check
        %p285 = pneg %p284
      $region50: #{tpu_custom_call.1} parent=5 // pred_check_branch
        %287 = sbr.rel (%p285) target = $region52
      $region51: #{tpu_custom_call.1} parent=5 // pred_region
        %s288 = ssub.s32 %s14, 2
        // Predicated region
        $region53: #{tpu_custom_call.1} parent=51 // pred_check
          %p289 = pneg %p124
        $region54: #{tpu_custom_call.1} parent=51 // pred_check_branch
          %291 = sbr.rel (%p289) target = $region56
        $region55: #{tpu_custom_call.1} parent=51 // pred_region
          %p292 = scmp.lt.s32.totalorder %s27, 1
          %s293 = scalar_select %p292, %s27, 1
          %p294 = scmp.lt.s32.totalorder %s28, 0
          %s295 = scalar_select %p294, %s28, 0
          %s296 = sadd.s32 %s295, %s293
          %s297 = smul.addr %s296, 4
          %s298 = scalar_lea.vmem %s2, %s297
        $region56: #{tpu_custom_call.1} parent=51 // pred_fallthru
          _
      $region52: #{tpu_custom_call.1} parent=5 // pred_fallthru
        _
    $region6: #{tpu_custom_call.1} parent=1 // loop_footer
      %s18 = sadd.s32 1, %s14
    $region7: #{tpu_custom_call.1} parent=1 // loop_footer_branch
      %13 = sbr.rel target = $region3
    $region8: #{tpu_custom_call.1} parent=1 // loop_exit
      _
    %299 = vsyncpa [#allocation3], 1
    %s300 = scalar_lea.sflag [#allocation3], 1
    %301 = vsyncpa %s300, 1
    %302 = vsyncpa [#allocation5], 1
    %s303 = scalar_lea.sflag [#allocation5], 1
    %304 = vsyncpa %s303, 1

</llo_original>
